<compile_context>
chip_gen: v5e
topology: v5e:2x2
jax: 0.10.0
libtpu: 0.0.40
codegen_flags: <defaults>
</compile_context>

<pallas_src>
import functools
from typing import NamedTuple, Tuple

import jax
import jax.numpy as jnp
from jax.experimental import pallas as pl
from jax.experimental.pallas import tpu as pltpu


# ----------------------------- helpers ------------------------------------


def _round_up(x: int, m: int) -> int:
    return ((x + m - 1) // m) * m


def _sublane_multiple(dtype) -> int:
    return {4: 8, 2: 16, 1: 32}.get(jnp.dtype(dtype).itemsize, 8)


def _vmem_capacity_bytes() -> int:
    """Physical VMEM of the attached TPU (128 MiB v5e/v6e, 64 MiB v7x)."""
    try:
        info = pltpu.get_tpu_info()
        cap = getattr(info, "vmem_capacity_bytes", None)
        if cap:
            return int(cap)
    except Exception:
        pass
    return 128 << 20


_HAS_BUFFERED = hasattr(pl, "Buffered")


def _resident_spec(shape, use_buffered: bool) -> pl.BlockSpec:
    """Grid-invariant operand: constant index_map, single pipeline buffer."""
    index_map = lambda i, _n=len(shape): (0,) * _n
    if use_buffered:
        return pl.BlockSpec(shape, index_map, pipeline_mode=pl.Buffered(1))
    return pl.BlockSpec(shape, index_map)


# ------------------------------ kernel ------------------------------------


def _mlp_fused_kernel(*refs, num_layers: int, ifsigmoid: bool, compute_dtype):
    """Whole MLP applied to one row tile.

    refs = (x_ref, w0_ref, b0_ref, w1_ref, b1_ref, ..., o_ref)
    Matmuls accumulate in f32 on the MXU; bias-add / ReLU / sigmoid run in
    f32; activations are cast to `compute_dtype` to feed the next matmul.
    """
    x_ref = refs[0]
    o_ref = refs[-1]
    wb = refs[1:-1]

    h = x_ref[...]
    if h.dtype != compute_dtype:
        h = h.astype(compute_dtype)

    for i in range(num_layers):
        w_ref = wb[2 * i]
        b_ref = wb[2 * i + 1]
        y = jnp.dot(h, w_ref[...], preferred_element_type=jnp.float32)
        y = y + b_ref[...].astype(jnp.float32)  # (1, tn) broadcasts over rows
        if i < num_layers - 1:
            y = jnp.maximum(y, 0.0)
            h = y.astype(compute_dtype)
        else:
            if ifsigmoid:
                y = jax.nn.sigmoid(y)
            o_ref[...] = y.astype(o_ref.dtype)


# --------------------------- parameter prep --------------------------------


class PreparedMLP(NamedTuple):
    weights_p: Tuple       # padded [in_p, out_p], compute_dtype
    biases_p: Tuple        # padded [1, out_p], f32
    weights: Tuple         # raw (for fallback path)
    biases: Tuple
    dims: Tuple            # (input_dim, hidden..., output_dim)
    dims_p: Tuple          # dims rounded up to multiples of 128
    compute_dtype: jnp.dtype


def prepare_mlp_params(weights, biases, compute_dtype=jnp.bfloat16) -> PreparedMLP:
    """Pad every feature dim to a multiple of 128 (lane-dense) and cast
    weights to the MXU compute dtype.  Done once; reused every forward."""
    dims = (weights[0].shape[0],) + tuple(w.shape[1] for w in weights)
    dims_p = tuple(_round_up(d, 128) for d in dims)
    weights_p, biases_p = [], []
    for li, (w, b) in enumerate(zip(weights, biases)):
        kin, kout = dims_p[li], dims_p[li + 1]
        w_p = jnp.pad(w, ((0, kin - w.shape[0]), (0, kout - w.shape[1])))
        b_p = jnp.pad(b, (0, kout - b.shape[0])).reshape(1, kout)
        weights_p.append(w_p.astype(compute_dtype))
        biases_p.append(b_p.astype(jnp.float32))
    return PreparedMLP(tuple(weights_p), tuple(biases_p), tuple(weights),
                       tuple(biases), dims, dims_p, jnp.dtype(compute_dtype))


def _mlp_xla_fallback(x, weights, biases, ifsigmoid, compute_dtype):
    """Plain XLA path for models whose weights exceed the VMEM budget."""
    # TODO(synk): tile the widest layer over its output dim (extra grid axis)
    # instead of falling back to XLA for >VMEM parameter sets.
    n = len(weights)
    h = x.astype(compute_dtype)
    y = None
    for i, (w, b) in enumerate(zip(weights, biases)):
        y = jnp.dot(h, w.astype(compute_dtype), preferred_element_type=jnp.float32)
        y = y + b.astype(jnp.float32)
        if i < n - 1:
            h = jnp.maximum(y, 0.0).astype(compute_dtype)
    if ifsigmoid:
        y = jax.nn.sigmoid(y)
    return y.astype(x.dtype)


# ----------------------------- forward pass --------------------------------


def mlp_apply_prepared(x, p: PreparedMLP, ifsigmoid: bool, *, tm: int = 512):
    num_layers = len(p.weights_p)
    M, K0 = x.shape
    assert K0 == p.dims[0], "input feature dim mismatch"
    dims_p = p.dims_p
    compute_dtype = p.compute_dtype
    out_dtype = x.dtype

    xb = jnp.dtype(x.dtype).itemsize
    ob = jnp.dtype(out_dtype).itemsize
    cb = jnp.dtype(compute_dtype).itemsize

    # --- row tile selection -------------------------------------------------
    sub = max(_sublane_multiple(x.dtype), _sublane_multiple(compute_dtype))
    m_aln = _round_up(M, sub)
    tm_eff = min(_round_up(tm, sub), m_aln)
    # Prefer >=2 row tiles when the batch is large enough (v7x megacore: two
    # TensorCores share grid axes marked "parallel"); keep tiles >=128 rows.
    if m_aln // tm_eff < 2 and m_aln >= 256:
        tm_eff = _round_up(-(-m_aln // 2), 128)

    # --- VMEM budget (generation-aware) ------------------------------------
    widest = max(dims_p)
    w_elems = sum(dims_p[i] * dims_p[i + 1] for i in range(num_layers))
    b_elems = sum(dims_p[1:])

    def footprint(rows: int, wbuf: int) -> int:
        params = wbuf * (cb * w_elems + 4 * b_elems)
        act = 2 * rows * (dims_p[0] * xb + dims_p[-1] * ob)   # pipelined tiles
        live = rows * widest * (2 * 4 + cb)                   # f32 temps + cast
        return params + act + live + (4 << 20)                # headroom

    cap = (_vmem_capacity_bytes() * 7) // 8
    wbuf_opt = 1 if _HAS_BUFFERED else 2
    while footprint(tm_eff, wbuf_opt) > cap and tm_eff > sub:
        tm_eff = max(_round_up(tm_eff // 2, sub), sub)
    if footprint(tm_eff, wbuf_opt) > cap:
        return _mlp_xla_fallback(x, p.weights, p.biases, ifsigmoid, compute_dtype)

    m_pad = _round_up(M, tm_eff)
    n_out = dims_p[-1]

    # --- pad x only when misaligned (cast happens in-kernel) ----------------
    if (m_pad, dims_p[0]) != (M, K0):
        x_p = jnp.pad(x, ((0, m_pad - M), (0, dims_p[0] - K0)))
    else:
        x_p = x

    inputs = [x_p]
    for li in range(num_layers):
        inputs.append(p.weights_p[li])
        inputs.append(p.biases_p[li])

    kernel = functools.partial(
        _mlp_fused_kernel,
        num_layers=num_layers,
        ifsigmoid=ifsigmoid,
        compute_dtype=compute_dtype,
    )

    def run(use_buffered: bool):
        in_specs = [pl.BlockSpec((tm_eff, dims_p[0]), lambda i: (i, 0))]
        for li in range(num_layers):
            kin, kout = dims_p[li], dims_p[li + 1]
            in_specs.append(_resident_spec((kin, kout), use_buffered))
            in_specs.append(_resident_spec((1, kout), use_buffered))
        out_spec = pl.BlockSpec((tm_eff, n_out), lambda i: (i, 0))
        wbuf = 1 if use_buffered else 2
        vmem_limit = int(min(max(footprint(tm_eff, wbuf), 32 << 20), cap))
        return pl.pallas_call(
            kernel,
            out_shape=jax.ShapeDtypeStruct((m_pad, n_out), out_dtype),
            grid_spec=pltpu.PrefetchScalarGridSpec(
                num_scalar_prefetch=0,
                grid=(m_pad // tm_eff,),
                in_specs=in_specs,
                out_specs=out_spec,
            ),
            compiler_params=pltpu.CompilerParams(
                dimension_semantics=("parallel",),
                vmem_limit_bytes=vmem_limit,
            ),
        )(*inputs)

    if _HAS_BUFFERED:
        try:
            out_p = run(True)
        except Exception:
            out_p = run(False)   # runtime rejected Buffered(1): plain specs
    else:
        out_p = run(False)

    if (m_pad, n_out) != (M, p.dims[-1]):
        out_p = out_p[:M, :p.dims[-1]]
    return out_p


def mlp_forward(x, weights, biases, ifsigmoid, *, tm: int = 512,
                compute_dtype=jnp.bfloat16):
    """Convenience wrapper (pads/casts params on the fly; prefer MLPPallas
    which caches the prepared parameters across calls)."""
    prepared = prepare_mlp_params(weights, biases, compute_dtype)
    return mlp_apply_prepared(x, prepared, ifsigmoid, tm=tm)


# ------------------------------ module ------------------------------------


class MLPPallas:
    """Mirror of the PyTorch MLP: num_layers Linear layers, ReLU between,
    optional sigmoid on the output.  Weights stored as [in_dim, out_dim].
    Padded / dtype-cast parameters are cached per compute_dtype."""

    def __init__(self, input_dim, hidden_dim, output_dim, num_layers,
                 ifsigmoid=False, *, key=None, dtype=jnp.float32):
        self.num_layers = num_layers
        self.ifsigmoid = ifsigmoid
        h = [hidden_dim] * (num_layers - 1)
        dims_in = [input_dim] + h
        dims_out = h + [output_dim]
        if key is None:
            key = jax.random.PRNGKey(0)
        self.weights = []
        self.biases = []
        for n, k in zip(dims_in, dims_out):
            key, kw, kb = jax.random.split(key, 3)
            # torch nn.Linear default init: U(-1/sqrt(fan_in), 1/sqrt(fan_in))
            bound = 1.0 / (n ** 0.5)
            w = jax.random.uniform(kw, (n, k), dtype=dtype, minval=-bound, maxval=bound)
            b = jax.random.uniform(kb, (k,), dtype=dtype, minval=-bound, maxval=bound)
            self.weights.append(w)
            self.biases.append(b)
        self._prepared = {}

    def _prepare(self, compute_dtype) -> PreparedMLP:
        name = jnp.dtype(compute_dtype).name
        if name not in self._prepared:
            self._prepared[name] = prepare_mlp_params(
                self.weights, self.biases, compute_dtype)
        return self._prepared[name]

    def __call__(self, x, *, tm: int = 512, compute_dtype=jnp.bfloat16):
        prepared = self._prepare(compute_dtype)
        return mlp_apply_prepared(x, prepared, self.ifsigmoid, tm=tm)


# ----------------------------- reference ----------------------------------


def mlp_reference(x, weights, biases, ifsigmoid):
    """Pure-JAX f32 reference matching the torch forward."""
    n = len(weights)
    for i, (w, b) in enumerate(zip(weights, biases)):
        x = x @ w + b
        if i < n - 1:
            x = jnp.maximum(x, 0.0)
    if ifsigmoid:
        x = jax.nn.sigmoid(x)
    return x


# ------------------------------- tests ------------------------------------


if __name__ == "__main__":
    key = jax.random.PRNGKey(0)
    k_in, k_p1, k_in2, k_p2, k_in3, k_p3 = jax.random.split(key, 6)

    # ---- case 1: sigmoid head, tiny shapes; strict f32 + default bf16 ----
    batch = 16
    input_dim, hidden_dim, output_dim, num_layers = 32, 32, 16, 3
    x = jax.random.normal(k_in, (batch, input_dim), dtype=jnp.float32)
    mlp = MLPPallas(input_dim, hidden_dim, output_dim, num_layers,
                    ifsigmoid=True, key=k_p1)
    ref = mlp_reference(x, mlp.weights, mlp.biases, True)

    out_f32 = jax.block_until_ready(mlp(x, compute_dtype=jnp.float32))
    assert out_f32.shape == (batch, output_dim)
    assert jnp.allclose(out_f32, ref, atol=1e-5, rtol=1e-5), "case-1 f32 mismatch"

    out_bf16 = jax.block_until_ready(mlp(x))   # default: bf16 MXU path
    assert out_bf16.shape == (batch, output_dim)
    assert jnp.allclose(out_bf16, ref, atol=3e-2, rtol=3e-2), "case-1 bf16 mismatch"

    # ---- case 2: no sigmoid, non-128 / non-tile-multiple dims (padding) ----
    batch2 = 50
    in2, hid2, outd2, layers2 = 48, 64, 5, 2
    x2 = jax.random.normal(k_in2, (batch2, in2), dtype=jnp.float32)
    mlp2 = MLPPallas(in2, hid2, outd2, layers2, ifsigmoid=False, key=k_p2)
    ref2 = mlp_reference(x2, mlp2.weights, mlp2.biases, False)

    out2 = jax.block_until_ready(mlp2(x2, compute_dtype=jnp.float32))
    assert out2.shape == (batch2, outd2)
    assert jnp.allclose(out2, ref2, atol=1e-5, rtol=1e-5), "case-2 mismatch"

    # ---- case 3: multi-row-tile grid (>=2 tiles for megacore), bf16 path ----
    batch3 = 272
    in3, hid3, outd3, layers3 = 128, 256, 64, 3
    x3 = jax.random.normal(k_in3, (batch3, in3), dtype=jnp.float32)
    mlp3 = MLPPallas(in3, hid3, outd3, layers3, ifsigmoid=False, key=k_p3)
    ref3 = mlp_reference(x3, mlp3.weights, mlp3.biases, False)

    out3 = jax.block_until_ready(mlp3(x3))     # default bf16
    assert out3.shape == (batch3, outd3)
    assert jnp.allclose(out3, ref3, atol=5e-2, rtol=5e-2), "case-3 bf16 mismatch"

    out3_f32 = jax.block_until_ready(mlp3(x3, compute_dtype=jnp.float32))
    assert jnp.allclose(out3_f32, ref3, atol=2e-2, rtol=2e-2), "case-3 f32 mismatch"

    print("KERNEL_OK")
</pallas_src>

<mosaic_0001>
module attributes {stable_mosaic.version = 11 : i64} {
  func.func @_mlp_fused_kernel(%arg0: i32, %arg1: memref<16x128xf32, #tpu.memory_space<vmem>>, %arg2: memref<128x128xf32, #tpu.memory_space<vmem>>, %arg3: memref<1x128xf32, #tpu.memory_space<vmem>>, %arg4: memref<128x128xf32, #tpu.memory_space<vmem>>, %arg5: memref<1x128xf32, #tpu.memory_space<vmem>>, %arg6: memref<128x128xf32, #tpu.memory_space<vmem>>, %arg7: memref<1x128xf32, #tpu.memory_space<vmem>>, %arg8: memref<16x128xf32, #tpu.memory_space<vmem>>) attributes {dimension_semantics = [#tpu.dimension_semantics<parallel>], iteration_bounds = array<i64: 1>, scalar_prefetch = 0 : i64, scratch_operands = 0 : i64, tpu.core_type = #tpu.core_type<tc>, window_params = [{transform_indices = @transform_0, window_bounds = array<i64: 16, 128>}, {pipeline_mode = #tpu.pipeline_mode<synchronous>, transform_indices = @transform_1, window_bounds = array<i64: 128, 128>}, {pipeline_mode = #tpu.pipeline_mode<synchronous>, transform_indices = @transform_2, window_bounds = array<i64: 1, 128>}, {pipeline_mode = #tpu.pipeline_mode<synchronous>, transform_indices = @transform_3, window_bounds = array<i64: 128, 128>}, {pipeline_mode = #tpu.pipeline_mode<synchronous>, transform_indices = @transform_4, window_bounds = array<i64: 1, 128>}, {pipeline_mode = #tpu.pipeline_mode<synchronous>, transform_indices = @transform_5, window_bounds = array<i64: 128, 128>}, {pipeline_mode = #tpu.pipeline_mode<synchronous>, transform_indices = @transform_6, window_bounds = array<i64: 1, 128>}, {transform_indices = @transform_7, window_bounds = array<i64: 16, 128>}]} {
    %c0 = arith.constant 0 : index
    %c0_0 = arith.constant 0 : index
    %0 = vector.load %arg1[%c0, %c0_0] : memref<16x128xf32, #tpu.memory_space<vmem>>, vector<16x128xf32>
    %c0_1 = arith.constant 0 : index
    %c0_2 = arith.constant 0 : index
    %1 = vector.load %arg2[%c0_1, %c0_2] : memref<128x128xf32, #tpu.memory_space<vmem>>, vector<128x128xf32>
    %cst = arith.constant dense<0.000000e+00> : vector<16x128xf32>
    %2 = tpu.matmul %0, %1, %cst {dimension_numbers = #tpu.dot_dimension_numbers<[1], [0], [0], [1], [0, 0, 1, 1], [], []>} : vector<16x128xf32>, vector<128x128xf32>, vector<16x128xf32> -> vector<16x128xf32>
    %c0_3 = arith.constant 0 : index
    %c0_4 = arith.constant 0 : index
    %3 = vector.load %arg3[%c0_3, %c0_4] : memref<1x128xf32, #tpu.memory_space<vmem>>, vector<1x128xf32>
    %4 = vector.broadcast %3 : vector<1x128xf32> to vector<16x128xf32>
    %5 = arith.addf %2, %4 : vector<16x128xf32>
    %cst_5 = arith.constant 0.000000e+00 : f32
    %6 = vector.broadcast %cst_5 : f32 to vector<16x128xf32>
    %7 = arith.maximumf %5, %6 : vector<16x128xf32>
    %c0_6 = arith.constant 0 : index
    %c0_7 = arith.constant 0 : index
    %8 = vector.load %arg4[%c0_6, %c0_7] : memref<128x128xf32, #tpu.memory_space<vmem>>, vector<128x128xf32>
    %cst_8 = arith.constant dense<0.000000e+00> : vector<16x128xf32>
    %9 = tpu.matmul %7, %8, %cst_8 {dimension_numbers = #tpu.dot_dimension_numbers<[1], [0], [0], [1], [0, 0, 1, 1], [], []>} : vector<16x128xf32>, vector<128x128xf32>, vector<16x128xf32> -> vector<16x128xf32>
    %c0_9 = arith.constant 0 : index
    %c0_10 = arith.constant 0 : index
    %10 = vector.load %arg5[%c0_9, %c0_10] : memref<1x128xf32, #tpu.memory_space<vmem>>, vector<1x128xf32>
    %11 = vector.broadcast %10 : vector<1x128xf32> to vector<16x128xf32>
    %12 = arith.addf %9, %11 : vector<16x128xf32>
    %cst_11 = arith.constant 0.000000e+00 : f32
    %13 = vector.broadcast %cst_11 : f32 to vector<16x128xf32>
    %14 = arith.maximumf %12, %13 : vector<16x128xf32>
    %c0_12 = arith.constant 0 : index
    %c0_13 = arith.constant 0 : index
    %15 = vector.load %arg6[%c0_12, %c0_13] : memref<128x128xf32, #tpu.memory_space<vmem>>, vector<128x128xf32>
    %cst_14 = arith.constant dense<0.000000e+00> : vector<16x128xf32>
    %16 = tpu.matmul %14, %15, %cst_14 {dimension_numbers = #tpu.dot_dimension_numbers<[1], [0], [0], [1], [0, 0, 1, 1], [], []>} : vector<16x128xf32>, vector<128x128xf32>, vector<16x128xf32> -> vector<16x128xf32>
    %c0_15 = arith.constant 0 : index
    %c0_16 = arith.constant 0 : index
    %17 = vector.load %arg7[%c0_15, %c0_16] : memref<1x128xf32, #tpu.memory_space<vmem>>, vector<1x128xf32>
    %18 = vector.broadcast %17 : vector<1x128xf32> to vector<16x128xf32>
    %19 = arith.addf %16, %18 : vector<16x128xf32>
    %20 = arith.negf %19 : vector<16x128xf32>
    %21 = math.exp %20 : vector<16x128xf32>
    %cst_17 = arith.constant 1.000000e+00 : f32
    %22 = vector.broadcast %cst_17 : f32 to vector<16x128xf32>
    %23 = arith.addf %22, %21 : vector<16x128xf32>
    %24 = arith.divf %22, %23 : vector<16x128xf32>
    %c0_18 = arith.constant 0 : index
    %c0_19 = arith.constant 0 : index
    %25 = vector.load %arg8[%c0_18, %c0_19] : memref<16x128xf32, #tpu.memory_space<vmem>>, vector<16x128xf32>
    tpu.vector_store %arg8[%c0_18, %c0_19], %24 {strides = array<i32>} : memref<16x128xf32, #tpu.memory_space<vmem>>, vector<16x128xf32>,
    return
  }
  func.func @transform_0(%arg0: i32) -> (i32, i32) {
    %c0_i32 = arith.constant 0 : i32
    %c0_i32_0 = arith.constant 0 : i32
    return %arg0, %c0_i32 : i32, i32
  }
  func.func @transform_1(%arg0: i32) -> (i32, i32) {
    %c0_i32 = arith.constant 0 : i32
    %c0_i32_0 = arith.constant 0 : i32
    %c0_i32_1 = arith.constant 0 : i32
    return %c0_i32, %c0_i32_0 : i32, i32
  }
  func.func @transform_2(%arg0: i32) -> (i32, i32) {
    %c0_i32 = arith.constant 0 : i32
    %c0_i32_0 = arith.constant 0 : i32
    %c0_i32_1 = arith.constant 0 : i32
    return %c0_i32, %c0_i32_0 : i32, i32
  }
  func.func @transform_3(%arg0: i32) -> (i32, i32) {
    %c0_i32 = arith.constant 0 : i32
    %c0_i32_0 = arith.constant 0 : i32
    %c0_i32_1 = arith.constant 0 : i32
    return %c0_i32, %c0_i32_0 : i32, i32
  }
  func.func @transform_4(%arg0: i32) -> (i32, i32) {
    %c0_i32 = arith.constant 0 : i32
    %c0_i32_0 = arith.constant 0 : i32
    %c0_i32_1 = arith.constant 0 : i32
    return %c0_i32, %c0_i32_0 : i32, i32
  }
  func.func @transform_5(%arg0: i32) -> (i32, i32) {
    %c0_i32 = arith.constant 0 : i32
    %c0_i32_0 = arith.constant 0 : i32
    %c0_i32_1 = arith.constant 0 : i32
    return %c0_i32, %c0_i32_0 : i32, i32
  }
  func.func @transform_6(%arg0: i32) -> (i32, i32) {
    %c0_i32 = arith.constant 0 : i32
    %c0_i32_0 = arith.constant 0 : i32
    %c0_i32_1 = arith.constant 0 : i32
    return %c0_i32, %c0_i32_0 : i32, i32
  }
  func.func @transform_7(%arg0: i32) -> (i32, i32) {
    %c0_i32 = arith.constant 0 : i32
    %c0_i32_0 = arith.constant 0 : i32
    return %arg0, %c0_i32 : i32, i32
  }
}

module attributes {stable_mosaic.version = 11 : i64} {
  func.func @_mlp_fused_kernel(%arg0: i32, %arg1: memref<16x128xf32, #tpu.memory_space<vmem>>, %arg2: memref<128x128xf32, #tpu.memory_space<vmem>>, %arg3: memref<1x128xf32, #tpu.memory_space<vmem>>, %arg4: memref<128x128xf32, #tpu.memory_space<vmem>>, %arg5: memref<1x128xf32, #tpu.memory_space<vmem>>, %arg6: memref<128x128xf32, #tpu.memory_space<vmem>>, %arg7: memref<1x128xf32, #tpu.memory_space<vmem>>, %arg8: memref<16x128xf32, #tpu.memory_space<vmem>>) attributes {dimension_semantics = [#tpu.dimension_semantics<parallel>], iteration_bounds = array<i64: 1>, scalar_prefetch = 0 : i64, scratch_operands = 0 : i64, tpu.core_type = #tpu.core_type<tc>, window_params = [{transform_indices = @transform_0, window_bounds = array<i64: 16, 128>}, {pipeline_mode = #tpu.pipeline_mode<synchronous>, transform_indices = @transform_1, window_bounds = array<i64: 128, 128>}, {pipeline_mode = #tpu.pipeline_mode<synchronous>, transform_indices = @transform_2, window_bounds = array<i64: 1, 128>}, {pipeline_mode = #tpu.pipeline_mode<synchronous>, transform_indices = @transform_3, window_bounds = array<i64: 128, 128>}, {pipeline_mode = #tpu.pipeline_mode<synchronous>, transform_indices = @transform_4, window_bounds = array<i64: 1, 128>}, {pipeline_mode = #tpu.pipeline_mode<synchronous>, transform_indices = @transform_5, window_bounds = array<i64: 128, 128>}, {pipeline_mode = #tpu.pipeline_mode<synchronous>, transform_indices = @transform_6, window_bounds = array<i64: 1, 128>}, {transform_indices = @transform_7, window_bounds = array<i64: 16, 128>}]} {
    %c0 = arith.constant 0 : index
    %c0_0 = arith.constant 0 : index
    %0 = vector.load %arg1[%c0, %c0_0] : memref<16x128xf32, #tpu.memory_space<vmem>>, vector<16x128xf32>
    %c0_1 = arith.constant 0 : index
    %c0_2 = arith.constant 0 : index
    %1 = vector.load %arg2[%c0_1, %c0_2] : memref<128x128xf32, #tpu.memory_space<vmem>>, vector<128x128xf32>
    %cst = arith.constant dense<0.000000e+00> : vector<16x128xf32>
    %2 = tpu.matmul %0, %1, %cst {dimension_numbers = #tpu.dot_dimension_numbers<[1], [0], [0], [1], [0, 0, 1, 1], [], []>} : vector<16x128xf32>, vector<128x128xf32>, vector<16x128xf32> -> vector<16x128xf32>
    %c0_3 = arith.constant 0 : index
    %c0_4 = arith.constant 0 : index
    %3 = vector.load %arg3[%c0_3, %c0_4] : memref<1x128xf32, #tpu.memory_space<vmem>>, vector<1x128xf32>
    %4 = vector.broadcast %3 : vector<1x128xf32> to vector<16x128xf32>
    %5 = arith.addf %2, %4 : vector<16x128xf32>
    %cst_5 = arith.constant 0.000000e+00 : f32
    %6 = vector.broadcast %cst_5 : f32 to vector<16x128xf32>
    %7 = arith.maximumf %5, %6 : vector<16x128xf32>
    %c0_6 = arith.constant 0 : index
    %c0_7 = arith.constant 0 : index
    %8 = vector.load %arg4[%c0_6, %c0_7] : memref<128x128xf32, #tpu.memory_space<vmem>>, vector<128x128xf32>
    %cst_8 = arith.constant dense<0.000000e+00> : vector<16x128xf32>
    %9 = tpu.matmul %7, %8, %cst_8 {dimension_numbers = #tpu.dot_dimension_numbers<[1], [0], [0], [1], [0, 0, 1, 1], [], []>} : vector<16x128xf32>, vector<128x128xf32>, vector<16x128xf32> -> vector<16x128xf32>
    %c0_9 = arith.constant 0 : index
    %c0_10 = arith.constant 0 : index
    %10 = vector.load %arg5[%c0_9, %c0_10] : memref<1x128xf32, #tpu.memory_space<vmem>>, vector<1x128xf32>
    %11 = vector.broadcast %10 : vector<1x128xf32> to vector<16x128xf32>
    %12 = arith.addf %9, %11 : vector<16x128xf32>
    %cst_11 = arith.constant 0.000000e+00 : f32
    %13 = vector.broadcast %cst_11 : f32 to vector<16x128xf32>
    %14 = arith.maximumf %12, %13 : vector<16x128xf32>
    %c0_12 = arith.constant 0 : index
    %c0_13 = arith.constant 0 : index
    %15 = vector.load %arg6[%c0_12, %c0_13] : memref<128x128xf32, #tpu.memory_space<vmem>>, vector<128x128xf32>
    %cst_14 = arith.constant dense<0.000000e+00> : vector<16x128xf32>
    %16 = tpu.matmul %14, %15, %cst_14 {dimension_numbers = #tpu.dot_dimension_numbers<[1], [0], [0], [1], [0, 0, 1, 1], [], []>} : vector<16x128xf32>, vector<128x128xf32>, vector<16x128xf32> -> vector<16x128xf32>
    %c0_15 = arith.constant 0 : index
    %c0_16 = arith.constant 0 : index
    %17 = vector.load %arg7[%c0_15, %c0_16] : memref<1x128xf32, #tpu.memory_space<vmem>>, vector<1x128xf32>
    %18 = vector.broadcast %17 : vector<1x128xf32> to vector<16x128xf32>
    %19 = arith.addf %16, %18 : vector<16x128xf32>
    %20 = arith.negf %19 : vector<16x128xf32>
    %21 = math.exp %20 : vector<16x128xf32>
    %cst_17 = arith.constant 1.000000e+00 : f32
    %22 = vector.broadcast %cst_17 : f32 to vector<16x128xf32>
    %23 = arith.addf %22, %21 : vector<16x128xf32>
    %24 = arith.divf %22, %23 : vector<16x128xf32>
    %c0_18 = arith.constant 0 : index
    %c0_19 = arith.constant 0 : index
    %25 = vector.load %arg8[%c0_18, %c0_19] : memref<16x128xf32, #tpu.memory_space<vmem>>, vector<16x128xf32>
    tpu.vector_store %arg8[%c0_18, %c0_19], %24 {strides = array<i32>} : memref<16x128xf32, #tpu.memory_space<vmem>>, vector<16x128xf32>,
    return
  }
  func.func @transform_0(%arg0: i32) -> (i32, i32) {
    %c0_i32 = arith.constant 0 : i32
    %c0_i32_0 = arith.constant 0 : i32
    return %arg0, %c0_i32 : i32, i32
  }
  func.func @transform_1(%arg0: i32) -> (i32, i32) {
    %c0_i32 = arith.constant 0 : i32
    %c0_i32_0 = arith.constant 0 : i32
    %c0_i32_1 = arith.constant 0 : i32
    return %c0_i32, %c0_i32_0 : i32, i32
  }
  func.func @transform_2(%arg0: i32) -> (i32, i32) {
    %c0_i32 = arith.constant 0 : i32
    %c0_i32_0 = arith.constant 0 : i32
    %c0_i32_1 = arith.constant 0 : i32
    return %c0_i32, %c0_i32_0 : i32, i32
  }
  func.func @transform_3(%arg0: i32) -> (i32, i32) {
    %c0_i32 = arith.constant 0 : i32
    %c0_i32_0 = arith.constant 0 : i32
    %c0_i32_1 = arith.constant 0 : i32
    return %c0_i32, %c0_i32_0 : i32, i32
  }
  func.func @transform_4(%arg0: i32) -> (i32, i32) {
    %c0_i32 = arith.constant 0 : i32
    %c0_i32_0 = arith.constant 0 : i32
    %c0_i32_1 = arith.constant 0 : i32
    return %c0_i32, %c0_i32_0 : i32, i32
  }
  func.func @transform_5(%arg0: i32) -> (i32, i32) {
    %c0_i32 = arith.constant 0 : i32
    %c0_i32_0 = arith.constant 0 : i32
    %c0_i32_1 = arith.constant 0 : i32
    return %c0_i32, %c0_i32_0 : i32, i32
  }
  func.func @transform_6(%arg0: i32) -> (i32, i32) {
    %c0_i32 = arith.constant 0 : i32
    %c0_i32_0 = arith.constant 0 : i32
    %c0_i32_1 = arith.constant 0 : i32
    return %c0_i32, %c0_i32_0 : i32, i32
  }
  func.func @transform_7(%arg0: i32) -> (i32, i32) {
    %c0_i32 = arith.constant 0 : i32
    %c0_i32_0 = arith.constant 0 : i32
    return %arg0, %c0_i32 : i32, i32
  }
}

</mosaic_0001>

<llo_original>
// kernel: tpu_custom_call.1
$region0: #{tpu_custom_call.1}
  #allocation0 [shape = 'u32[]', space=smem, size = 0x4, offset = 0x4, fixed_abs, tag = 'smem constant byte address 0x4 - core index']
  #allocation1 [shape = 'u32[72,128]{1,0:T(1,128)}', space=vmem, size = 0x9000, scoped, tag = 'internal scratch']
  %s0 = inlined_call_operand.hbm [shape: f32[16,128], index: 0, kind: input, shape index: {}]
  %s1 = inlined_call_operand.hbm [shape: f32[128,128], index: 1, kind: input, shape index: {}]
  %s2 = inlined_call_operand.vmem [shape: f32[1,128], index: 2, kind: input, shape index: {}]
  %s3 = inlined_call_operand.hbm [shape: f32[128,128], index: 3, kind: input, shape index: {}]
  %s4 = inlined_call_operand.vmem [shape: f32[1,128], index: 4, kind: input, shape index: {}]
  %s5 = inlined_call_operand.hbm [shape: f32[128,128], index: 5, kind: input, shape index: {}]
  %s6 = inlined_call_operand.vmem [shape: f32[1,128], index: 6, kind: input, shape index: {}]
  %s7 = inlined_call_operand.hbm [shape: f32[16,128], index: 7, kind: output, shape index: {}]
  %s8 = sld [smem:[#allocation0]]
  $region54: #{tpu_custom_call.1} parent=0
    _
  %s10 = ssub.s32 1, %s8
  %s11 = scalar_select 0, %s10, %s8
  $region1: #{tpu_custom_call.1} parent=0
    #allocation2 [shape = 'u8[8192]{0}', space=vmem, size = 0x2000, scoped, tag = 'input window, operand 0, single buffered']
    #allocation3 [shape = 's32[1]{0}', space=sflag, size = 0x4, scoped, tag = 'scoped memory for tpu_custom_call.1']
    #allocation4 [shape = 's32[1]{0}', space=sflag, size = 0x4, scoped, tag = 'scoped memory for tpu_custom_call.1']
    #allocation5 [shape = 'u8[65536]{0}', space=vmem, size = 0x10000, scoped, tag = 'input window, operand 1, single buffered']
    #allocation6 [shape = 's32[1]{0}', space=sflag, size = 0x4, scoped, tag = 'scoped memory for tpu_custom_call.1']
    #allocation7 [shape = 'u8[65536]{0}', space=vmem, size = 0x10000, scoped, tag = 'input window, operand 3, single buffered']
    #allocation8 [shape = 'u8[65536]{0}', space=vmem, size = 0x10000, scoped, tag = 'input window, operand 5, single buffered']
    #allocation9 [shape = 's32[1]{0}', space=sflag, size = 0x4, scoped, tag = 'scoped memory for tpu_custom_call.1']
    #allocation10 [shape = 'u8[8192]{0}', space=vmem, size = 0x2000, scoped, tag = 'output window, operand 0, single buffered']
    %12 = vsyncpa [#allocation3], 0
    %13 = vsyncpa [#allocation6], 0
    %14 = vsyncpa [#allocation9], 0
    %15 = vsyncpa [#allocation4], 0
    // Predicated region
    $region2: #{tpu_custom_call.1} parent=1 // pred_check
      _
    $region3: #{tpu_custom_call.1} parent=1 // pred_check_branch
      %17 = sbr.rel (0) target = $region5
    $region4: #{tpu_custom_call.1} parent=1 // pred_region
      %19 = vsyncadd [#allocation3], 0
      %s20 = sshll.u32 %s0, 4
      %s21 = int_to_ptr.hbm [resolvable:$true] %s20
      %s22 = sshll.u32 [#allocation2], 4
      %s23 = int_to_ptr.vmem [resolvable:$true] %s22
      %28 = dma.hbm_to_vmem [thread:$0]  %s21, 256, %s23, [#allocation3], 128, 128, 8
    $region5: #{tpu_custom_call.1} parent=1 // pred_fallthru
      _
    // Predicated region
    $region6: #{tpu_custom_call.1} parent=1 // pred_check
      _
    $region7: #{tpu_custom_call.1} parent=1 // pred_check_branch
      %30 = sbr.rel (0) target = $region9
    $region8: #{tpu_custom_call.1} parent=1 // pred_region
      %32 = vsyncadd [#allocation6], 0
      %s33 = sshll.u32 %s1, 4
      %s34 = int_to_ptr.hbm [resolvable:$true] %s33
      %s35 = sshll.u32 [#allocation5], 4
      %s36 = int_to_ptr.vmem [resolvable:$true] %s35
      %41 = dma.hbm_to_vmem [thread:$0]  %s34, 2048, %s36, [#allocation6], 128, 128, 8
    $region9: #{tpu_custom_call.1} parent=1 // pred_fallthru
      _
    // Predicated region
    $region10: #{tpu_custom_call.1} parent=1 // pred_check
      _
    $region11: #{tpu_custom_call.1} parent=1 // pred_check_branch
      %43 = sbr.rel (0) target = $region13
    $region12: #{tpu_custom_call.1} parent=1 // pred_region
      _
    $region13: #{tpu_custom_call.1} parent=1 // pred_fallthru
      _
    // Predicated region
    $region14: #{tpu_custom_call.1} parent=1 // pred_check
      _
    $region15: #{tpu_custom_call.1} parent=1 // pred_check_branch
      %45 = sbr.rel (0) target = $region17
    $region16: #{tpu_custom_call.1} parent=1 // pred_region
      %47 = vsyncadd [#allocation6], 0
      %s48 = sshll.u32 %s3, 4
      %s49 = int_to_ptr.hbm [resolvable:$true] %s48
      %s50 = sshll.u32 [#allocation7], 4
      %s51 = int_to_ptr.vmem [resolvable:$true] %s50
      %56 = dma.hbm_to_vmem [thread:$0]  %s49, 2048, %s51, [#allocation6], 128, 128, 8
    $region17: #{tpu_custom_call.1} parent=1 // pred_fallthru
      _
    // Predicated region
    $region18: #{tpu_custom_call.1} parent=1 // pred_check
      _
    $region19: #{tpu_custom_call.1} parent=1 // pred_check_branch
      %58 = sbr.rel (0) target = $region21
    $region20: #{tpu_custom_call.1} parent=1 // pred_region
      _
    $region21: #{tpu_custom_call.1} parent=1 // pred_fallthru
      _
    // Predicated region
    $region22: #{tpu_custom_call.1} parent=1 // pred_check
      _
    $region23: #{tpu_custom_call.1} parent=1 // pred_check_branch
      %60 = sbr.rel (0) target = $region25
    $region24: #{tpu_custom_call.1} parent=1 // pred_region
      %62 = vsyncadd [#allocation9], 0
      %s63 = sshll.u32 %s5, 4
      %s64 = int_to_ptr.hbm [resolvable:$true] %s63
      %s65 = sshll.u32 [#allocation8], 4
      %s66 = int_to_ptr.vmem [resolvable:$true] %s65
      %71 = dma.hbm_to_vmem [thread:$0]  %s64, 2048, %s66, [#allocation9], 128, 128, 8
    $region25: #{tpu_custom_call.1} parent=1 // pred_fallthru
      _
    // Predicated region
    $region26: #{tpu_custom_call.1} parent=1 // pred_check
      _
    $region27: #{tpu_custom_call.1} parent=1 // pred_check_branch
      %73 = sbr.rel (0) target = $region29
    $region28: #{tpu_custom_call.1} parent=1 // pred_region
      _
    $region29: #{tpu_custom_call.1} parent=1 // pred_fallthru
      _
    // Predicated region
    $region30: #{tpu_custom_call.1} parent=1 // pred_check
      _
    $region31: #{tpu_custom_call.1} parent=1 // pred_check_branch
      %75 = sbr.rel (0) target = $region33
    $region32: #{tpu_custom_call.1} parent=1 // pred_region
      %77 = dma.done [#allocation3], 256
    $region33: #{tpu_custom_call.1} parent=1 // pred_fallthru
      _
    // Predicated region
    $region34: #{tpu_custom_call.1} parent=1 // pred_check
      _
    $region35: #{tpu_custom_call.1} parent=1 // pred_check_branch
      %79 = sbr.rel (0) target = $region37
    $region36: #{tpu_custom_call.1} parent=1 // pred_region
      %81 = dma.done [#allocation6], 2048
    $region37: #{tpu_custom_call.1} parent=1 // pred_fallthru
      _
    // Predicated region
    $region38: #{tpu_custom_call.1} parent=1 // pred_check
      _
    $region39: #{tpu_custom_call.1} parent=1 // pred_check_branch
      %83 = sbr.rel (0) target = $region41
    $region40: #{tpu_custom_call.1} parent=1 // pred_region
      %85 = dma.done [#allocation6], 2048
    $region41: #{tpu_custom_call.1} parent=1 // pred_fallthru
      _
    // Predicated region
    $region42: #{tpu_custom_call.1} parent=1 // pred_check
      _
    $region43: #{tpu_custom_call.1} parent=1 // pred_check_branch
      %87 = sbr.rel (0) target = $region45
    $region44: #{tpu_custom_call.1} parent=1 // pred_region
      %89 = dma.done [#allocation9], 2048
    $region45: #{tpu_custom_call.1} parent=1 // pred_fallthru
      _
    %v90 = vld [vmem:[#allocation2] sm:$0xff]
    %v91 = vld [vmem:[#allocation2 + $0x8] sm:$0xff]
    %v92 = vld [vmem:[#allocation5] sm:$0xff]
    %v93 = vld [vmem:[#allocation5 + $0x8] sm:$0xff]
    %v94 = vld [vmem:[#allocation5 + $0x10] sm:$0xff]
    %v95 = vld [vmem:[#allocation5 + $0x18] sm:$0xff]
    %v96 = vld [vmem:[#allocation5 + $0x20] sm:$0xff]
    %v97 = vld [vmem:[#allocation5 + $0x28] sm:$0xff]
    %v98 = vld [vmem:[#allocation5 + $0x30] sm:$0xff]
    %v99 = vld [vmem:[#allocation5 + $0x38] sm:$0xff]
    %v100 = vld [vmem:[#allocation5 + $0x40] sm:$0xff]
    %v101 = vld [vmem:[#allocation5 + $0x48] sm:$0xff]
    %v102 = vld [vmem:[#allocation5 + $0x50] sm:$0xff]
    %v103 = vld [vmem:[#allocation5 + $0x58] sm:$0xff]
    %v104 = vld [vmem:[#allocation5 + $0x60] sm:$0xff]
    %v105 = vld [vmem:[#allocation5 + $0x68] sm:$0xff]
    %v106 = vld [vmem:[#allocation5 + $0x70] sm:$0xff]
    %v107 = vld [vmem:[#allocation5 + $0x78] sm:$0xff]
    %v108 = vld [vmem:[%s2] sm:$0x1]
    %v110 = vperm.slane %v108, 0
    %112 = vmatpush.msra.mxu0 %v107
    %113 = vmatpush.msra.mxu0 %v106
    %114 = vmatpush.msra.mxu0 %v105
    %115 = vmatpush.msra.mxu0 %v104
    %116 = vmatpush.msra.mxu0 %v103
    %117 = vmatpush.msra.mxu0 %v102
    %118 = vmatpush.msra.mxu0 %v101
    %119 = vmatpush.msra.mxu0 %v100
    %120 = vmatpush.msra.mxu0 %v99
    %121 = vmatpush.msra.mxu0 %v98
    %122 = vmatpush.msra.mxu0 %v97
    %123 = vmatpush.msra.mxu0 %v96
    %124 = vmatpush.msra.mxu0 %v95
    %125 = vmatpush.msra.mxu0 %v94
    %126 = vmatpush.msra.mxu0 %v93
    %127 = vmatpush.msra.mxu0 %v92
    %128 = vmatmul.f32.gmra.mxu0 %v90
    %v129 = vpop.f32.mrf.mxu0
    %v130 = vadd.f32 %v110, %v129
    %131 = vmatmul.f32.gmra.mxu0 %v91
    %v132 = vpop.f32.mrf.mxu0
    %v133 = vadd.f32 %v110, %v132
    %134 = vdwg.mxu0
    %v135 = vmax.f32 %v130, 0.0
    %v136 = vmax.f32 %v133, 0.0
    %v137 = vld [vmem:[#allocation7] sm:$0xff]
    %v138 = vld [vmem:[#allocation7 + $0x8] sm:$0xff]
    %v139 = vld [vmem:[#allocation7 + $0x10] sm:$0xff]
    %v140 = vld [vmem:[#allocation7 + $0x18] sm:$0xff]
    %v141 = vld [vmem:[#allocation7 + $0x20] sm:$0xff]
    %v142 = vld [vmem:[#allocation7 + $0x28] sm:$0xff]
    %v143 = vld [vmem:[#allocation7 + $0x30] sm:$0xff]
    %v144 = vld [vmem:[#allocation7 + $0x38] sm:$0xff]
    %v145 = vld [vmem:[#allocation7 + $0x40] sm:$0xff]
    %v146 = vld [vmem:[#allocation7 + $0x48] sm:$0xff]
    %v147 = vld [vmem:[#allocation7 + $0x50] sm:$0xff]
    %v148 = vld [vmem:[#allocation7 + $0x58] sm:$0xff]
    %v149 = vld [vmem:[#allocation7 + $0x60] sm:$0xff]
    %v150 = vld [vmem:[#allocation7 + $0x68] sm:$0xff]
    %v151 = vld [vmem:[#allocation7 + $0x70] sm:$0xff]
    %v152 = vld [vmem:[#allocation7 + $0x78] sm:$0xff]
    %v153 = vld [vmem:[%s4] sm:$0x1]
    %v155 = vperm.slane %v153, 0
    %157 = vmatpush.msra.mxu0 %v152
    %158 = vmatpush.msra.mxu0 %v151
    %159 = vmatpush.msra.mxu0 %v150
    %160 = vmatpush.msra.mxu0 %v149
    %161 = vmatpush.msra.mxu0 %v148
    %162 = vmatpush.msra.mxu0 %v147
    %163 = vmatpush.msra.mxu0 %v146
    %164 = vmatpush.msra.mxu0 %v145
    %165 = vmatpush.msra.mxu0 %v144
    %166 = vmatpush.msra.mxu0 %v143
    %167 = vmatpush.msra.mxu0 %v142
    %168 = vmatpush.msra.mxu0 %v141
    %169 = vmatpush.msra.mxu0 %v140
    %170 = vmatpush.msra.mxu0 %v139
    %171 = vmatpush.msra.mxu0 %v138
    %172 = vmatpush.msra.mxu0 %v137
    %173 = vmatmul.f32.gmra.mxu0 %v135
    %v174 = vpop.f32.mrf.mxu0
    %v175 = vadd.f32 %v155, %v174
    %176 = vmatmul.f32.gmra.mxu0 %v136
    %v177 = vpop.f32.mrf.mxu0
    %v178 = vadd.f32 %v155, %v177
    %179 = vdwg.mxu0
    %v180 = vmax.f32 %v175, 0.0
    %v181 = vmax.f32 %v178, 0.0
    %v182 = vld [vmem:[#allocation8] sm:$0xff]
    %v183 = vld [vmem:[#allocation8 + $0x8] sm:$0xff]
    %v184 = vld [vmem:[#allocation8 + $0x10] sm:$0xff]
    %v185 = vld [vmem:[#allocation8 + $0x18] sm:$0xff]
    %v186 = vld [vmem:[#allocation8 + $0x20] sm:$0xff]
    %v187 = vld [vmem:[#allocation8 + $0x28] sm:$0xff]
    %v188 = vld [vmem:[#allocation8 + $0x30] sm:$0xff]
    %v189 = vld [vmem:[#allocation8 + $0x38] sm:$0xff]
    %v190 = vld [vmem:[#allocation8 + $0x40] sm:$0xff]
    %v191 = vld [vmem:[#allocation8 + $0x48] sm:$0xff]
    %v192 = vld [vmem:[#allocation8 + $0x50] sm:$0xff]
    %v193 = vld [vmem:[#allocation8 + $0x58] sm:$0xff]
    %v194 = vld [vmem:[#allocation8 + $0x60] sm:$0xff]
    %v195 = vld [vmem:[#allocation8 + $0x68] sm:$0xff]
    %v196 = vld [vmem:[#allocation8 + $0x70] sm:$0xff]
    %v197 = vld [vmem:[#allocation8 + $0x78] sm:$0xff]
    %v198 = vld [vmem:[%s6] sm:$0x1]
    %v200 = vperm.slane %v198, 0
    %202 = vmatpush.msra.mxu0 %v197
    %203 = vmatpush.msra.mxu0 %v196
    %204 = vmatpush.msra.mxu0 %v195
    %205 = vmatpush.msra.mxu0 %v194
    %206 = vmatpush.msra.mxu0 %v193
    %207 = vmatpush.msra.mxu0 %v192
    %208 = vmatpush.msra.mxu0 %v191
    %209 = vmatpush.msra.mxu0 %v190
    %210 = vmatpush.msra.mxu0 %v189
    %211 = vmatpush.msra.mxu0 %v188
    %212 = vmatpush.msra.mxu0 %v187
    %213 = vmatpush.msra.mxu0 %v186
    %214 = vmatpush.msra.mxu0 %v185
    %215 = vmatpush.msra.mxu0 %v184
    %216 = vmatpush.msra.mxu0 %v183
    %217 = vmatpush.msra.mxu0 %v182
    %218 = vmatmul.f32.gmra.mxu0 %v180
    %v219 = vpop.f32.mrf.mxu0
    %v220 = vadd.f32 %v200, %v219
    %221 = vmatmul.f32.gmra.mxu0 %v181
    %v222 = vpop.f32.mrf.mxu0
    %v223 = vadd.f32 %v200, %v222
    %224 = vdwg.mxu0
    %v225 = vxor.u32 %v220, 2147483648
    %v226 = vxor.u32 %v223, 2147483648
    %v227 = vmul.f32 %v225, 1.442695
    %v228 = vpow.pop %v227
    %v229 = vmul.f32 %v226, 1.442695
    %v230 = vpow.pop %v229
    %v231 = vadd.f32 %v228, 1.0
    %v232 = vadd.f32 %v230, 1.0
    %v233 = vrcp.pop %v231
    %v234 = vmul.f32 %v231, %v233
    %v235 = vsub.f32 1.0, %v234
    %v236 = vmul.f32 %v233, %v235
    %v237 = vadd.f32 %v233, %v236
    %vm238 = vweird.f32 %v231
    %vm239 = vweird.f32 %v233
    %vm240 = vmor %vm238, %vm239
    %v241 = vsel %vm240, %v233, %v237
    %v242 = vand.u32 2147483647, %v231
    %vm243 = vcmp.eq.f32.partialorder %v242, 8.507059e+37
    %v244 = vand.u32 %v231, 2147483648
    %v245 = vor.u32 1.1754944e-38, %v244
    %v246 = vsel %vm243, %v245, %v241
    %v247 = vmul.f32 1.0, %v246
    %v248 = vrcp.pop %v232
    %v249 = vmul.f32 %v232, %v248
    %v250 = vsub.f32 1.0, %v249
    %v251 = vmul.f32 %v248, %v250
    %v252 = vadd.f32 %v248, %v251
    %vm253 = vweird.f32 %v232
    %vm254 = vweird.f32 %v248
    %vm255 = vmor %vm253, %vm254
    %v256 = vsel %vm255, %v248, %v252
    %v257 = vand.u32 2147483647, %v232
    %vm258 = vcmp.eq.f32.partialorder %v257, 8.507059e+37
    %v259 = vand.u32 %v232, 2147483648
    %v260 = vor.u32 1.1754944e-38, %v259
    %v261 = vsel %vm258, %v260, %v256
    %v262 = vmul.f32 1.0, %v261
    %263 = vst [vmem:[#allocation10] sm:$0xff] %v247
    %264 = vst [vmem:[#allocation10 + $0x8] sm:$0xff] %v262
    // Predicated region
    $region46: #{tpu_custom_call.1} parent=1 // pred_check
      _
    $region47: #{tpu_custom_call.1} parent=1 // pred_check_branch
      %266 = sbr.rel (0) target = $region49
    $region48: #{tpu_custom_call.1} parent=1 // pred_region
      %268 = vsyncadd [#allocation4], 0
      %s269 = sshll.u32 [#allocation10], 4
      %s270 = int_to_ptr.vmem [resolvable:$true] %s269
      %s271 = sshll.u32 %s7, 4
      %s272 = int_to_ptr.hbm [resolvable:$true] %s271
      %277 = dma.vmem_to_hbm [thread:$0]  %s270, 256, %s272, [#allocation4], 128, 128, 8
    $region49: #{tpu_custom_call.1} parent=1 // pred_fallthru
      _
    // Predicated region
    $region50: #{tpu_custom_call.1} parent=1 // pred_check
      _
    $region51: #{tpu_custom_call.1} parent=1 // pred_check_branch
      %279 = sbr.rel (0) target = $region53
    $region52: #{tpu_custom_call.1} parent=1 // pred_region
      %281 = dma.done [#allocation4], 256
    $region53: #{tpu_custom_call.1} parent=1 // pred_fallthru
      _
    %282 = vsyncpa [#allocation3], 1
    %283 = vsyncpa [#allocation6], 1
    %284 = vsyncpa [#allocation9], 1
    %285 = vsyncpa [#allocation4], 1

// kernel: tpu_custom_call.1
$region0: #{tpu_custom_call.1}
  #allocation0 [shape = 'u32[]', space=smem, size = 0x4, offset = 0x4, fixed_abs, tag = 'smem constant byte address 0x4 - core index']
  #allocation1 [shape = 'u32[72,128]{1,0:T(1,128)}', space=vmem, size = 0x9000, scoped, tag = 'internal scratch']
  %s0 = inlined_call_operand.hbm [shape: f32[16,128], index: 0, kind: input, shape index: {}]
  %s1 = inlined_call_operand.hbm [shape: f32[128,128], index: 1, kind: input, shape index: {}]
  %s2 = inlined_call_operand.vmem [shape: f32[1,128], index: 2, kind: input, shape index: {}]
  %s3 = inlined_call_operand.hbm [shape: f32[128,128], index: 3, kind: input, shape index: {}]
  %s4 = inlined_call_operand.vmem [shape: f32[1,128], index: 4, kind: input, shape index: {}]
  %s5 = inlined_call_operand.hbm [shape: f32[128,128], index: 5, kind: input, shape index: {}]
  %s6 = inlined_call_operand.vmem [shape: f32[1,128], index: 6, kind: input, shape index: {}]
  %s7 = inlined_call_operand.hbm [shape: f32[16,128], index: 7, kind: output, shape index: {}]
  %s8 = sld [smem:[#allocation0]]
  $region54: #{tpu_custom_call.1} parent=0
    _
  %s10 = ssub.s32 1, %s8
  %s11 = scalar_select 0, %s10, %s8
  $region1: #{tpu_custom_call.1} parent=0
    #allocation2 [shape = 'u8[8192]{0}', space=vmem, size = 0x2000, scoped, tag = 'input window, operand 0, single buffered']
    #allocation3 [shape = 's32[1]{0}', space=sflag, size = 0x4, scoped, tag = 'scoped memory for tpu_custom_call.1']
    #allocation4 [shape = 's32[1]{0}', space=sflag, size = 0x4, scoped, tag = 'scoped memory for tpu_custom_call.1']
    #allocation5 [shape = 'u8[65536]{0}', space=vmem, size = 0x10000, scoped, tag = 'input window, operand 1, single buffered']
    #allocation6 [shape = 's32[1]{0}', space=sflag, size = 0x4, scoped, tag = 'scoped memory for tpu_custom_call.1']
    #allocation7 [shape = 'u8[65536]{0}', space=vmem, size = 0x10000, scoped, tag = 'input window, operand 3, single buffered']
    #allocation8 [shape = 'u8[65536]{0}', space=vmem, size = 0x10000, scoped, tag = 'input window, operand 5, single buffered']
    #allocation9 [shape = 's32[1]{0}', space=sflag, size = 0x4, scoped, tag = 'scoped memory for tpu_custom_call.1']
    #allocation10 [shape = 'u8[8192]{0}', space=vmem, size = 0x2000, scoped, tag = 'output window, operand 0, single buffered']
    %12 = vsyncpa [#allocation3], 0
    %13 = vsyncpa [#allocation6], 0
    %14 = vsyncpa [#allocation9], 0
    %15 = vsyncpa [#allocation4], 0
    // Predicated region
    $region2: #{tpu_custom_call.1} parent=1 // pred_check
      _
    $region3: #{tpu_custom_call.1} parent=1 // pred_check_branch
      %17 = sbr.rel (0) target = $region5
    $region4: #{tpu_custom_call.1} parent=1 // pred_region
      %19 = vsyncadd [#allocation3], 0
      %s20 = sshll.u32 %s0, 4
      %s21 = int_to_ptr.hbm [resolvable:$true] %s20
      %s22 = sshll.u32 [#allocation2], 4
      %s23 = int_to_ptr.vmem [resolvable:$true] %s22
      %28 = dma.hbm_to_vmem [thread:$0]  %s21, 256, %s23, [#allocation3], 128, 128, 8
    $region5: #{tpu_custom_call.1} parent=1 // pred_fallthru
      _
    // Predicated region
    $region6: #{tpu_custom_call.1} parent=1 // pred_check
      _
    $region7: #{tpu_custom_call.1} parent=1 // pred_check_branch
      %30 = sbr.rel (0) target = $region9
    $region8: #{tpu_custom_call.1} parent=1 // pred_region
      %32 = vsyncadd [#allocation6], 0
      %s33 = sshll.u32 %s1, 4
      %s34 = int_to_ptr.hbm [resolvable:$true] %s33
      %s35 = sshll.u32 [#allocation5], 4
      %s36 = int_to_ptr.vmem [resolvable:$true] %s35
      %41 = dma.hbm_to_vmem [thread:$0]  %s34, 2048, %s36, [#allocation6], 128, 128, 8
    $region9: #{tpu_custom_call.1} parent=1 // pred_fallthru
      _
    // Predicated region
    $region10: #{tpu_custom_call.1} parent=1 // pred_check
      _
    $region11: #{tpu_custom_call.1} parent=1 // pred_check_branch
      %43 = sbr.rel (0) target = $region13
    $region12: #{tpu_custom_call.1} parent=1 // pred_region
      _
    $region13: #{tpu_custom_call.1} parent=1 // pred_fallthru
      _
    // Predicated region
    $region14: #{tpu_custom_call.1} parent=1 // pred_check
      _
    $region15: #{tpu_custom_call.1} parent=1 // pred_check_branch
      %45 = sbr.rel (0) target = $region17
    $region16: #{tpu_custom_call.1} parent=1 // pred_region
      %47 = vsyncadd [#allocation6], 0
      %s48 = sshll.u32 %s3, 4
      %s49 = int_to_ptr.hbm [resolvable:$true] %s48
      %s50 = sshll.u32 [#allocation7], 4
      %s51 = int_to_ptr.vmem [resolvable:$true] %s50
      %56 = dma.hbm_to_vmem [thread:$0]  %s49, 2048, %s51, [#allocation6], 128, 128, 8
    $region17: #{tpu_custom_call.1} parent=1 // pred_fallthru
      _
    // Predicated region
    $region18: #{tpu_custom_call.1} parent=1 // pred_check
      _
    $region19: #{tpu_custom_call.1} parent=1 // pred_check_branch
      %58 = sbr.rel (0) target = $region21
    $region20: #{tpu_custom_call.1} parent=1 // pred_region
      _
    $region21: #{tpu_custom_call.1} parent=1 // pred_fallthru
      _
    // Predicated region
    $region22: #{tpu_custom_call.1} parent=1 // pred_check
      _
    $region23: #{tpu_custom_call.1} parent=1 // pred_check_branch
      %60 = sbr.rel (0) target = $region25
    $region24: #{tpu_custom_call.1} parent=1 // pred_region
      %62 = vsyncadd [#allocation9], 0
      %s63 = sshll.u32 %s5, 4
      %s64 = int_to_ptr.hbm [resolvable:$true] %s63
      %s65 = sshll.u32 [#allocation8], 4
      %s66 = int_to_ptr.vmem [resolvable:$true] %s65
      %71 = dma.hbm_to_vmem [thread:$0]  %s64, 2048, %s66, [#allocation9], 128, 128, 8
    $region25: #{tpu_custom_call.1} parent=1 // pred_fallthru
      _
    // Predicated region
    $region26: #{tpu_custom_call.1} parent=1 // pred_check
      _
    $region27: #{tpu_custom_call.1} parent=1 // pred_check_branch
      %73 = sbr.rel (0) target = $region29
    $region28: #{tpu_custom_call.1} parent=1 // pred_region
      _
    $region29: #{tpu_custom_call.1} parent=1 // pred_fallthru
      _
    // Predicated region
    $region30: #{tpu_custom_call.1} parent=1 // pred_check
      _
    $region31: #{tpu_custom_call.1} parent=1 // pred_check_branch
      %75 = sbr.rel (0) target = $region33
    $region32: #{tpu_custom_call.1} parent=1 // pred_region
      %77 = dma.done [#allocation3], 256
    $region33: #{tpu_custom_call.1} parent=1 // pred_fallthru
      _
    // Predicated region
    $region34: #{tpu_custom_call.1} parent=1 // pred_check
      _
    $region35: #{tpu_custom_call.1} parent=1 // pred_check_branch
      %79 = sbr.rel (0) target = $region37
    $region36: #{tpu_custom_call.1} parent=1 // pred_region
      %81 = dma.done [#allocation6], 2048
    $region37: #{tpu_custom_call.1} parent=1 // pred_fallthru
      _
    // Predicated region
    $region38: #{tpu_custom_call.1} parent=1 // pred_check
      _
    $region39: #{tpu_custom_call.1} parent=1 // pred_check_branch
      %83 = sbr.rel (0) target = $region41
    $region40: #{tpu_custom_call.1} parent=1 // pred_region
      %85 = dma.done [#allocation6], 2048
    $region41: #{tpu_custom_call.1} parent=1 // pred_fallthru
      _
    // Predicated region
    $region42: #{tpu_custom_call.1} parent=1 // pred_check
      _
    $region43: #{tpu_custom_call.1} parent=1 // pred_check_branch
      %87 = sbr.rel (0) target = $region45
    $region44: #{tpu_custom_call.1} parent=1 // pred_region
      %89 = dma.done [#allocation9], 2048
    $region45: #{tpu_custom_call.1} parent=1 // pred_fallthru
      _
    %v90 = vld [vmem:[#allocation2] sm:$0xff]
    %v91 = vld [vmem:[#allocation2 + $0x8] sm:$0xff]
    %v92 = vld [vmem:[#allocation5] sm:$0xff]
    %v93 = vld [vmem:[#allocation5 + $0x8] sm:$0xff]
    %v94 = vld [vmem:[#allocation5 + $0x10] sm:$0xff]
    %v95 = vld [vmem:[#allocation5 + $0x18] sm:$0xff]
    %v96 = vld [vmem:[#allocation5 + $0x20] sm:$0xff]
    %v97 = vld [vmem:[#allocation5 + $0x28] sm:$0xff]
    %v98 = vld [vmem:[#allocation5 + $0x30] sm:$0xff]
    %v99 = vld [vmem:[#allocation5 + $0x38] sm:$0xff]
    %v100 = vld [vmem:[#allocation5 + $0x40] sm:$0xff]
    %v101 = vld [vmem:[#allocation5 + $0x48] sm:$0xff]
    %v102 = vld [vmem:[#allocation5 + $0x50] sm:$0xff]
    %v103 = vld [vmem:[#allocation5 + $0x58] sm:$0xff]
    %v104 = vld [vmem:[#allocation5 + $0x60] sm:$0xff]
    %v105 = vld [vmem:[#allocation5 + $0x68] sm:$0xff]
    %v106 = vld [vmem:[#allocation5 + $0x70] sm:$0xff]
    %v107 = vld [vmem:[#allocation5 + $0x78] sm:$0xff]
    %v108 = vld [vmem:[%s2] sm:$0x1]
    %v110 = vperm.slane %v108, 0
    %112 = vmatpush.msra.mxu0 %v107
    %113 = vmatpush.msra.mxu0 %v106
    %114 = vmatpush.msra.mxu0 %v105
    %115 = vmatpush.msra.mxu0 %v104
    %116 = vmatpush.msra.mxu0 %v103
    %117 = vmatpush.msra.mxu0 %v102
    %118 = vmatpush.msra.mxu0 %v101
    %119 = vmatpush.msra.mxu0 %v100
    %120 = vmatpush.msra.mxu0 %v99
    %121 = vmatpush.msra.mxu0 %v98
    %122 = vmatpush.msra.mxu0 %v97
    %123 = vmatpush.msra.mxu0 %v96
    %124 = vmatpush.msra.mxu0 %v95
    %125 = vmatpush.msra.mxu0 %v94
    %126 = vmatpush.msra.mxu0 %v93
    %127 = vmatpush.msra.mxu0 %v92
    %128 = vmatmul.f32.gmra.mxu0 %v90
    %v129 = vpop.f32.mrf.mxu0
    %v130 = vadd.f32 %v110, %v129
    %131 = vmatmul.f32.gmra.mxu0 %v91
    %v132 = vpop.f32.mrf.mxu0
    %v133 = vadd.f32 %v110, %v132
    %134 = vdwg.mxu0
    %v135 = vmax.f32 %v130, 0.0
    %v136 = vmax.f32 %v133, 0.0
    %v137 = vld [vmem:[#allocation7] sm:$0xff]
    %v138 = vld [vmem:[#allocation7 + $0x8] sm:$0xff]
    %v139 = vld [vmem:[#allocation7 + $0x10] sm:$0xff]
    %v140 = vld [vmem:[#allocation7 + $0x18] sm:$0xff]
    %v141 = vld [vmem:[#allocation7 + $0x20] sm:$0xff]
    %v142 = vld [vmem:[#allocation7 + $0x28] sm:$0xff]
    %v143 = vld [vmem:[#allocation7 + $0x30] sm:$0xff]
    %v144 = vld [vmem:[#allocation7 + $0x38] sm:$0xff]
    %v145 = vld [vmem:[#allocation7 + $0x40] sm:$0xff]
    %v146 = vld [vmem:[#allocation7 + $0x48] sm:$0xff]
    %v147 = vld [vmem:[#allocation7 + $0x50] sm:$0xff]
    %v148 = vld [vmem:[#allocation7 + $0x58] sm:$0xff]
    %v149 = vld [vmem:[#allocation7 + $0x60] sm:$0xff]
    %v150 = vld [vmem:[#allocation7 + $0x68] sm:$0xff]
    %v151 = vld [vmem:[#allocation7 + $0x70] sm:$0xff]
    %v152 = vld [vmem:[#allocation7 + $0x78] sm:$0xff]
    %v153 = vld [vmem:[%s4] sm:$0x1]
    %v155 = vperm.slane %v153, 0
    %157 = vmatpush.msra.mxu0 %v152
    %158 = vmatpush.msra.mxu0 %v151
    %159 = vmatpush.msra.mxu0 %v150
    %160 = vmatpush.msra.mxu0 %v149
    %161 = vmatpush.msra.mxu0 %v148
    %162 = vmatpush.msra.mxu0 %v147
    %163 = vmatpush.msra.mxu0 %v146
    %164 = vmatpush.msra.mxu0 %v145
    %165 = vmatpush.msra.mxu0 %v144
    %166 = vmatpush.msra.mxu0 %v143
    %167 = vmatpush.msra.mxu0 %v142
    %168 = vmatpush.msra.mxu0 %v141
    %169 = vmatpush.msra.mxu0 %v140
    %170 = vmatpush.msra.mxu0 %v139
    %171 = vmatpush.msra.mxu0 %v138
    %172 = vmatpush.msra.mxu0 %v137
    %173 = vmatmul.f32.gmra.mxu0 %v135
    %v174 = vpop.f32.mrf.mxu0
    %v175 = vadd.f32 %v155, %v174
    %176 = vmatmul.f32.gmra.mxu0 %v136
    %v177 = vpop.f32.mrf.mxu0
    %v178 = vadd.f32 %v155, %v177
    %179 = vdwg.mxu0
    %v180 = vmax.f32 %v175, 0.0
    %v181 = vmax.f32 %v178, 0.0
    %v182 = vld [vmem:[#allocation8] sm:$0xff]
    %v183 = vld [vmem:[#allocation8 + $0x8] sm:$0xff]
    %v184 = vld [vmem:[#allocation8 + $0x10] sm:$0xff]
    %v185 = vld [vmem:[#allocation8 + $0x18] sm:$0xff]
    %v186 = vld [vmem:[#allocation8 + $0x20] sm:$0xff]
    %v187 = vld [vmem:[#allocation8 + $0x28] sm:$0xff]
    %v188 = vld [vmem:[#allocation8 + $0x30] sm:$0xff]
    %v189 = vld [vmem:[#allocation8 + $0x38] sm:$0xff]
    %v190 = vld [vmem:[#allocation8 + $0x40] sm:$0xff]
    %v191 = vld [vmem:[#allocation8 + $0x48] sm:$0xff]
    %v192 = vld [vmem:[#allocation8 + $0x50] sm:$0xff]
    %v193 = vld [vmem:[#allocation8 + $0x58] sm:$0xff]
    %v194 = vld [vmem:[#allocation8 + $0x60] sm:$0xff]
    %v195 = vld [vmem:[#allocation8 + $0x68] sm:$0xff]
    %v196 = vld [vmem:[#allocation8 + $0x70] sm:$0xff]
    %v197 = vld [vmem:[#allocation8 + $0x78] sm:$0xff]
    %v198 = vld [vmem:[%s6] sm:$0x1]
    %v200 = vperm.slane %v198, 0
    %202 = vmatpush.msra.mxu0 %v197
    %203 = vmatpush.msra.mxu0 %v196
    %204 = vmatpush.msra.mxu0 %v195
    %205 = vmatpush.msra.mxu0 %v194
    %206 = vmatpush.msra.mxu0 %v193
    %207 = vmatpush.msra.mxu0 %v192
    %208 = vmatpush.msra.mxu0 %v191
    %209 = vmatpush.msra.mxu0 %v190
    %210 = vmatpush.msra.mxu0 %v189
    %211 = vmatpush.msra.mxu0 %v188
    %212 = vmatpush.msra.mxu0 %v187
    %213 = vmatpush.msra.mxu0 %v186
    %214 = vmatpush.msra.mxu0 %v185
    %215 = vmatpush.msra.mxu0 %v184
    %216 = vmatpush.msra.mxu0 %v183
    %217 = vmatpush.msra.mxu0 %v182
    %218 = vmatmul.f32.gmra.mxu0 %v180
    %v219 = vpop.f32.mrf.mxu0
    %v220 = vadd.f32 %v200, %v219
    %221 = vmatmul.f32.gmra.mxu0 %v181
    %v222 = vpop.f32.mrf.mxu0
    %v223 = vadd.f32 %v200, %v222
    %224 = vdwg.mxu0
    %v225 = vxor.u32 %v220, 2147483648
    %v226 = vxor.u32 %v223, 2147483648
    %v227 = vmul.f32 %v225, 1.442695
    %v228 = vpow.pop %v227
    %v229 = vmul.f32 %v226, 1.442695
    %v230 = vpow.pop %v229
    %v231 = vadd.f32 %v228, 1.0
    %v232 = vadd.f32 %v230, 1.0
    %v233 = vrcp.pop %v231
    %v234 = vmul.f32 %v231, %v233
    %v235 = vsub.f32 1.0, %v234
    %v236 = vmul.f32 %v233, %v235
    %v237 = vadd.f32 %v233, %v236
    %vm238 = vweird.f32 %v231
    %vm239 = vweird.f32 %v233
    %vm240 = vmor %vm238, %vm239
    %v241 = vsel %vm240, %v233, %v237
    %v242 = vand.u32 2147483647, %v231
    %vm243 = vcmp.eq.f32.partialorder %v242, 8.507059e+37
    %v244 = vand.u32 %v231, 2147483648
    %v245 = vor.u32 1.1754944e-38, %v244
    %v246 = vsel %vm243, %v245, %v241
    %v247 = vmul.f32 1.0, %v246
    %v248 = vrcp.pop %v232
    %v249 = vmul.f32 %v232, %v248
    %v250 = vsub.f32 1.0, %v249
    %v251 = vmul.f32 %v248, %v250
    %v252 = vadd.f32 %v248, %v251
    %vm253 = vweird.f32 %v232
    %vm254 = vweird.f32 %v248
    %vm255 = vmor %vm253, %vm254
    %v256 = vsel %vm255, %v248, %v252
    %v257 = vand.u32 2147483647, %v232
    %vm258 = vcmp.eq.f32.partialorder %v257, 8.507059e+37
    %v259 = vand.u32 %v232, 2147483648
    %v260 = vor.u32 1.1754944e-38, %v259
    %v261 = vsel %vm258, %v260, %v256
    %v262 = vmul.f32 1.0, %v261
    %263 = vst [vmem:[#allocation10] sm:$0xff] %v247
    %264 = vst [vmem:[#allocation10 + $0x8] sm:$0xff] %v262
    // Predicated region
    $region46: #{tpu_custom_call.1} parent=1 // pred_check
      _
    $region47: #{tpu_custom_call.1} parent=1 // pred_check_branch
      %266 = sbr.rel (0) target = $region49
    $region48: #{tpu_custom_call.1} parent=1 // pred_region
      %268 = vsyncadd [#allocation4], 0
      %s269 = sshll.u32 [#allocation10], 4
      %s270 = int_to_ptr.vmem [resolvable:$true] %s269
      %s271 = sshll.u32 %s7, 4
      %s272 = int_to_ptr.hbm [resolvable:$true] %s271
      %277 = dma.vmem_to_hbm [thread:$0]  %s270, 256, %s272, [#allocation4], 128, 128, 8
    $region49: #{tpu_custom_call.1} parent=1 // pred_fallthru
      _
    // Predicated region
    $region50: #{tpu_custom_call.1} parent=1 // pred_check
      _
    $region51: #{tpu_custom_call.1} parent=1 // pred_check_branch
      %279 = sbr.rel (0) target = $region53
    $region52: #{tpu_custom_call.1} parent=1 // pred_region
      %281 = dma.done [#allocation4], 256
    $region53: #{tpu_custom_call.1} parent=1 // pred_fallthru
      _
    %282 = vsyncpa [#allocation3], 1
    %283 = vsyncpa [#allocation6], 1
    %284 = vsyncpa [#allocation9], 1
    %285 = vsyncpa [#allocation4], 1

</llo_original>
